<compile_context>
chip_gen: v5e
topology: v5e:2x2
jax: 0.10.0
libtpu: 0.0.40
codegen_flags: <defaults>
</compile_context>

<pallas_src>
import functools

import jax
import jax.numpy as jnp
from jax import lax
from jax.experimental import pallas as pl
from jax.experimental.pallas import tpu as pltpu


def fire_kernel(x_ref, ws_ref, bs_ref, w1_ref, b1_ref, w3_ref, b3_ref,
                out_ref, pad_ref, *, width):
    # x_ref:   (bt, Cin, HW)        batch tile; channels=sublanes, H*W=lanes
    # ws_ref:  (Cs, Cin)            squeeze 1x1 weight
    # bs_ref:  (Cs, 1)              squeeze bias
    # w1_ref:  (C1, Cs)             expand1x1 weight
    # b1_ref:  (C1, 1)              expand1x1 bias
    # w3_ref:  (C3, 9*Cs)           expand3x3 weight, (ky,kx)-major im2col rows
    # b3_ref:  (C3, 1)              expand3x3 bias
    # out_ref: (bt, C1+C3, HW)
    # pad_ref: (Cs, HW + 2*(W+1))   VMEM scratch: squeeze act with zero halo
    bt, _, HW = x_ref.shape
    Cs = ws_ref.shape[0]
    C1 = w1_ref.shape[0]
    W = width
    PAD = W + 1                       # flattened halo width on each side

    # Zero only the halo slivers; the interior is fully overwritten below.
    zeros_halo = jnp.zeros((Cs, PAD), dtype=pad_ref.dtype)
    pad_ref[:, 0:PAD] = zeros_halo
    pad_ref[:, PAD + HW:PAD + HW + PAD] = zeros_halo

    # Lane masks for taps whose x-shift would wrap across image rows.
    col = lax.broadcasted_iota(jnp.int32, (1, HW), 1) % W
    not_left = col != 0               # valid lanes when dx == -1
    not_right = col != W - 1          # valid lanes when dx == +1

    # Hoist weight/bias loads out of the batch loop.
    ws = ws_ref[...]
    bs = bs_ref[...]
    w1 = w1_ref[...]
    b1 = b1_ref[...]
    w3 = w3_ref[...]
    b3 = b3_ref[...]

    for b in range(bt):               # small static unroll over the batch tile
        x2d = x_ref[b]                # (Cin, HW), lane-dense

        # --- squeeze 1x1 + ReLU --------------------------------------------
        sq = jnp.maximum(
            jnp.dot(ws, x2d, preferred_element_type=jnp.float32) + bs, 0.0)

        # --- expand 1x1 + ReLU: write back immediately (short live ranges) --
        e1 = jnp.maximum(
            jnp.dot(w1, sq, preferred_element_type=jnp.float32) + b1, 0.0)
        out_ref[b, 0:C1, :] = e1.astype(out_ref.dtype)

        # --- expand 3x3 (padding=1) + ReLU via im2col ------------------------
        pad_ref[:, PAD:PAD + HW] = sq
        taps = []
        for dy in (-1, 0, 1):
            for dx in (-1, 0, 1):
                start = PAD + dy * W + dx          # static lane offset
                t = pad_ref[:, start:start + HW]
                if dx == -1:
                    t = jnp.where(not_left, t, 0.0)
                elif dx == 1:
                    t = jnp.where(not_right, t, 0.0)
                taps.append(t)
        im = jnp.concatenate(taps, axis=0)          # (9*Cs, HW)
        e3 = jnp.maximum(
            jnp.dot(w3, im, preferred_element_type=jnp.float32) + b3, 0.0)
        out_ref[b, C1:, :] = e3.astype(out_ref.dtype)


@functools.partial(jax.jit, static_argnames=("batch_tile",))
def fire_forward(x_nchw, w_sq, b_sq, w_e1, b_e1, w_e3, b_e3, batch_tile=None):
    """x_nchw: (N, Cin, H, W). Weights in PyTorch OIHW layout:
         w_sq (Cs, Cin, 1, 1), w_e1 (C1, Cs, 1, 1), w_e3 (C3, Cs, 3, 3).
       Returns (N, C1 + C3, H, W), matching the PyTorch Fire forward."""
    N, Cin, H, W = x_nchw.shape
    Cs = w_sq.shape[0]
    C1 = w_e1.shape[0]
    C3 = w_e3.shape[0]
    Cout = C1 + C3
    HW = H * W

    if batch_tile is None:
        # Largest divisor of N whose per-step input block stays under ~2 MiB
        # (keeps double-buffered blocks comfortably inside VMEM on all gens
        # while amortizing the ~0.35 us per-grid-step overhead).
        budget = 2 * 1024 * 1024
        bt = 1
        for d in range(1, N + 1):
            if N % d == 0 and d * Cin * HW * 4 <= budget:
                bt = d
    else:
        bt = batch_tile
    assert N % bt == 0, (N, bt)

    f32 = jnp.float32
    # NCHW stays NCHW; flattening H*W is a free (contiguous) reshape.
    x_flat = x_nchw.reshape(N, Cin, HW).astype(f32)
    ws = w_sq[:, :, 0, 0].astype(f32)                                # (Cs, Cin)
    w1 = w_e1[:, :, 0, 0].astype(f32)                                # (C1, Cs)
    # OIHW -> (C3, ky, kx, Cs) -> (C3, 9*Cs); row order matches kernel taps.
    w3 = jnp.transpose(w_e3, (0, 2, 3, 1)).reshape(C3, 9 * Cs).astype(f32)
    bs = b_sq.reshape(Cs, 1).astype(f32)
    b1 = b_e1.reshape(C1, 1).astype(f32)
    b3 = b_e3.reshape(C3, 1).astype(f32)

    kernel = functools.partial(fire_kernel, width=W)
    out_flat = pl.pallas_call(
        kernel,
        out_shape=jax.ShapeDtypeStruct((N, Cout, HW), f32),
        grid_spec=pltpu.PrefetchScalarGridSpec(
            num_scalar_prefetch=0,
            grid=(N // bt,),
            in_specs=[
                pl.BlockSpec((bt, Cin, HW), lambda n: (n, 0, 0)),
                pl.BlockSpec((Cs, Cin), lambda n: (0, 0)),
                pl.BlockSpec((Cs, 1), lambda n: (0, 0)),
                pl.BlockSpec((C1, Cs), lambda n: (0, 0)),
                pl.BlockSpec((C1, 1), lambda n: (0, 0)),
                pl.BlockSpec((C3, 9 * Cs), lambda n: (0, 0)),
                pl.BlockSpec((C3, 1), lambda n: (0, 0)),
            ],
            out_specs=pl.BlockSpec((bt, Cout, HW), lambda n: (n, 0, 0)),
            scratch_shapes=[pltpu.VMEM((Cs, HW + 2 * (W + 1)), f32)],
        ),
        compiler_params=pltpu.CompilerParams(
            dimension_semantics=("parallel",)),
    )(x_flat, ws, bs, w1, b1, w3, b3)

    # Free reshape back to (N, Cout, H, W) == torch.cat([...], dim=1) layout.
    return out_flat.reshape(N, Cout, H, W)


def fire_reference(x_nchw, w_sq, b_sq, w_e1, b_e1, w_e3, b_e3):
    """Pure-JAX reference (NCHW / OIHW, same as PyTorch)."""
    dn = ('NCHW', 'OIHW', 'NCHW')
    sq = lax.conv_general_dilated(x_nchw, w_sq, (1, 1), 'VALID',
                                  dimension_numbers=dn)
    sq = jnp.maximum(sq + b_sq[None, :, None, None], 0.0)
    e1 = lax.conv_general_dilated(sq, w_e1, (1, 1), 'VALID',
                                  dimension_numbers=dn)
    e1 = jnp.maximum(e1 + b_e1[None, :, None, None], 0.0)
    e3 = lax.conv_general_dilated(sq, w_e3, (1, 1), ((1, 1), (1, 1)),
                                  dimension_numbers=dn)
    e3 = jnp.maximum(e3 + b_e3[None, :, None, None], 0.0)
    return jnp.concatenate([e1, e3], axis=1)


if __name__ == "__main__":
    # Small Fire config: Fire(inplanes=8, squeeze=4, expand1x1=8, expand3x3=8)
    N, Cin, H, W = 2, 8, 16, 16
    Cs, C1, C3 = 4, 8, 8

    key = jax.random.PRNGKey(0)
    ks = jax.random.split(key, 7)
    x = jax.random.normal(ks[0], (N, Cin, H, W), jnp.float32)
    w_sq = jax.random.normal(ks[1], (Cs, Cin, 1, 1), jnp.float32) * 0.2
    b_sq = jax.random.normal(ks[2], (Cs,), jnp.float32) * 0.1
    w_e1 = jax.random.normal(ks[3], (C1, Cs, 1, 1), jnp.float32) * 0.2
    b_e1 = jax.random.normal(ks[4], (C1,), jnp.float32) * 0.1
    w_e3 = jax.random.normal(ks[5], (C3, Cs, 3, 3), jnp.float32) * 0.2
    b_e3 = jax.random.normal(ks[6], (C3,), jnp.float32) * 0.1

    out = fire_forward(x, w_sq, b_sq, w_e1, b_e1, w_e3, b_e3)
    out = jax.block_until_ready(out)

    ref = fire_reference(x, w_sq, b_sq, w_e1, b_e1, w_e3, b_e3)
    assert out.shape == (N, C1 + C3, H, W), out.shape
    assert jnp.allclose(out, ref, atol=1e-4, rtol=1e-4), (
        float(jnp.max(jnp.abs(out - ref))))

    print("KERNEL_OK")
</pallas_src>

<mosaic_0001>
module attributes {stable_mosaic.version = 11 : i64} {
  func.func @fire_kernel(%arg0: i32, %arg1: memref<2x8x256xf32, #tpu.memory_space<vmem>>, %arg2: memref<4x8xf32, #tpu.memory_space<vmem>>, %arg3: memref<4x1xf32, #tpu.memory_space<vmem>>, %arg4: memref<8x4xf32, #tpu.memory_space<vmem>>, %arg5: memref<8x1xf32, #tpu.memory_space<vmem>>, %arg6: memref<8x36xf32, #tpu.memory_space<vmem>>, %arg7: memref<8x1xf32, #tpu.memory_space<vmem>>, %arg8: memref<2x16x256xf32, #tpu.memory_space<vmem>>, %arg9: memref<4x290xf32, #tpu.memory_space<vmem>>) attributes {dimension_semantics = [#tpu.dimension_semantics<parallel>], iteration_bounds = array<i64: 1>, scalar_prefetch = 0 : i64, scratch_operands = 1 : i64, tpu.core_type = #tpu.core_type<tc>, window_params = [{transform_indices = @transform_0, window_bounds = array<i64: 2, 8, 256>}, {pipeline_mode = #tpu.pipeline_mode<synchronous>, transform_indices = @transform_1, window_bounds = array<i64: 4, 8>}, {pipeline_mode = #tpu.pipeline_mode<synchronous>, transform_indices = @transform_2, window_bounds = array<i64: 4, 1>}, {pipeline_mode = #tpu.pipeline_mode<synchronous>, transform_indices = @transform_3, window_bounds = array<i64: 8, 4>}, {pipeline_mode = #tpu.pipeline_mode<synchronous>, transform_indices = @transform_4, window_bounds = array<i64: 8, 1>}, {pipeline_mode = #tpu.pipeline_mode<synchronous>, transform_indices = @transform_5, window_bounds = array<i64: 8, 36>}, {pipeline_mode = #tpu.pipeline_mode<synchronous>, transform_indices = @transform_6, window_bounds = array<i64: 8, 1>}, {transform_indices = @transform_7, window_bounds = array<i64: 2, 16, 256>}]} {
    %cst = arith.constant 0.000000e+00 : f32
    %0 = vector.broadcast %cst : f32 to vector<4x17xf32>
    %c0 = arith.constant 0 : index
    %c0_0 = arith.constant 0 : index
    %1 = vector.load %arg9[%c0, %c0_0] : memref<4x290xf32, #tpu.memory_space<vmem>>, vector<4x17xf32>
    tpu.vector_store %arg9[%c0, %c0_0], %0 {strides = array<i32>} : memref<4x290xf32, #tpu.memory_space<vmem>>, vector<4x17xf32>,
    %c0_1 = arith.constant 0 : index
    %c273 = arith.constant 273 : index
    %2 = vector.load %arg9[%c0_1, %c273] : memref<4x290xf32, #tpu.memory_space<vmem>>, vector<4x17xf32>
    tpu.vector_store %arg9[%c0_1, %c273], %0 {strides = array<i32>} : memref<4x290xf32, #tpu.memory_space<vmem>>, vector<4x17xf32>,
    %3 = tpu.iota {dimensions = array<i32: 1>} : vector<1x256xi32>
    %c16_i32 = arith.constant 16 : i32
    %c0_i32 = arith.constant 0 : i32
    %4 = arith.cmpi eq, %c16_i32, %c0_i32 : i32
    %c1_i32 = arith.constant 1 : i32
    %5 = arith.select %4, %c1_i32, %c16_i32 : i32
    %6 = vector.broadcast %5 : i32 to vector<1x256xi32>
    %7 = arith.remsi %3, %6 : vector<1x256xi32>
    %c0_i32_2 = arith.constant 0 : i32
    %8 = vector.broadcast %c0_i32_2 : i32 to vector<1x256xi32>
    %9 = arith.cmpi ne, %7, %8 : vector<1x256xi32>
    %c0_i32_3 = arith.constant 0 : i32
    %10 = vector.broadcast %c0_i32_3 : i32 to vector<1x256xi32>
    %11 = arith.cmpi slt, %7, %10 : vector<1x256xi32>
    %c0_i32_4 = arith.constant 0 : i32
    %12 = arith.cmpi slt, %5, %c0_i32_4 : i32
    %13 = vector.broadcast %12 : i1 to vector<1x256xi1>
    %14 = vector.broadcast %13 : vector<1x256xi1> to vector<1x256xi1>
    %15 = arith.xori %11, %14 : vector<1x256xi1>
    %16 = arith.andi %15, %9 : vector<1x256xi1>
    %17 = vector.broadcast %5 : i32 to vector<1x256xi32>
    %18 = arith.addi %7, %17 : vector<1x256xi32>
    %19 = arith.select %16, %18, %7 : vector<1x256xi1>, vector<1x256xi32>
    %c0_i32_5 = arith.constant 0 : i32
    %20 = vector.broadcast %c0_i32_5 : i32 to vector<1x256xi32>
    %21 = arith.cmpi ne, %19, %20 : vector<1x256xi32>
    %c15_i32 = arith.constant 15 : i32
    %22 = vector.broadcast %c15_i32 : i32 to vector<1x256xi32>
    %23 = arith.cmpi ne, %19, %22 : vector<1x256xi32>
    %c0_6 = arith.constant 0 : index
    %c0_7 = arith.constant 0 : index
    %24 = vector.load %arg2[%c0_6, %c0_7] : memref<4x8xf32, #tpu.memory_space<vmem>>, vector<4x8xf32>
    %c0_8 = arith.constant 0 : index
    %c0_9 = arith.constant 0 : index
    %25 = vector.load %arg3[%c0_8, %c0_9] : memref<4x1xf32, #tpu.memory_space<vmem>>, vector<4x1xf32>
    %c0_10 = arith.constant 0 : index
    %c0_11 = arith.constant 0 : index
    %26 = vector.load %arg4[%c0_10, %c0_11] : memref<8x4xf32, #tpu.memory_space<vmem>>, vector<8x4xf32>
    %c0_12 = arith.constant 0 : index
    %c0_13 = arith.constant 0 : index
    %27 = vector.load %arg5[%c0_12, %c0_13] : memref<8x1xf32, #tpu.memory_space<vmem>>, vector<8x1xf32>
    %c0_14 = arith.constant 0 : index
    %c0_15 = arith.constant 0 : index
    %28 = vector.load %arg6[%c0_14, %c0_15] : memref<8x36xf32, #tpu.memory_space<vmem>>, vector<8x36xf32>
    %c0_16 = arith.constant 0 : index
    %c0_17 = arith.constant 0 : index
    %29 = vector.load %arg7[%c0_16, %c0_17] : memref<8x1xf32, #tpu.memory_space<vmem>>, vector<8x1xf32>
    %c0_18 = arith.constant 0 : index
    %c0_19 = arith.constant 0 : index
    %c0_20 = arith.constant 0 : index
    %30 = vector.load %arg1[%c0_18, %c0_19, %c0_20] : memref<2x8x256xf32, #tpu.memory_space<vmem>>, vector<1x8x256xf32>
    %31 = vector.shape_cast %30 : vector<1x8x256xf32> to vector<8x256xf32>
    %cst_21 = arith.constant dense<0.000000e+00> : vector<4x256xf32>
    %32 = tpu.matmul %24, %31, %cst_21 {dimension_numbers = #tpu.dot_dimension_numbers<[1], [0], [0], [1], [0, 0, 1, 1], [], []>} : vector<4x8xf32>, vector<8x256xf32>, vector<4x256xf32> -> vector<4x256xf32>
    %33 = vector.broadcast %25 : vector<4x1xf32> to vector<4x256xf32>
    %34 = arith.addf %32, %33 : vector<4x256xf32>
    %cst_22 = arith.constant 0.000000e+00 : f32
    %35 = vector.broadcast %cst_22 : f32 to vector<4x256xf32>
    %36 = arith.maximumf %34, %35 : vector<4x256xf32>
    %cst_23 = arith.constant dense<0.000000e+00> : vector<8x256xf32>
    %37 = tpu.matmul %26, %36, %cst_23 {dimension_numbers = #tpu.dot_dimension_numbers<[1], [0], [0], [1], [0, 0, 1, 1], [], []>} : vector<8x4xf32>, vector<4x256xf32>, vector<8x256xf32> -> vector<8x256xf32>
    %38 = vector.broadcast %27 : vector<8x1xf32> to vector<8x256xf32>
    %39 = arith.addf %37, %38 : vector<8x256xf32>
    %cst_24 = arith.constant 0.000000e+00 : f32
    %40 = vector.broadcast %cst_24 : f32 to vector<8x256xf32>
    %41 = arith.maximumf %39, %40 : vector<8x256xf32>
    %c0_25 = arith.constant 0 : index
    %c0_26 = arith.constant 0 : index
    %c0_27 = arith.constant 0 : index
    %42 = vector.load %arg8[%c0_25, %c0_26, %c0_27] : memref<2x16x256xf32, #tpu.memory_space<vmem>>, vector<1x8x256xf32>
    %43 = vector.shape_cast %42 : vector<1x8x256xf32> to vector<8x256xf32>
    %44 = vector.shape_cast %41 : vector<8x256xf32> to vector<1x8x256xf32>
    tpu.vector_store %arg8[%c0_25, %c0_26, %c0_27], %44 {strides = array<i32>} : memref<2x16x256xf32, #tpu.memory_space<vmem>>, vector<1x8x256xf32>,
    %c0_28 = arith.constant 0 : index
    %c17 = arith.constant 17 : index
    %45 = vector.load %arg9[%c0_28, %c17] : memref<4x290xf32, #tpu.memory_space<vmem>>, vector<4x256xf32>
    tpu.vector_store %arg9[%c0_28, %c17], %36 {strides = array<i32>} : memref<4x290xf32, #tpu.memory_space<vmem>>, vector<4x256xf32>,
    %c0_29 = arith.constant 0 : index
    %c0_30 = arith.constant 0 : index
    %46 = vector.load %arg9[%c0_29, %c0_30] : memref<4x290xf32, #tpu.memory_space<vmem>>, vector<4x256xf32>
    %cst_31 = arith.constant 0.000000e+00 : f32
    %47 = vector.shape_cast %21 : vector<1x256xi1> to vector<1x256xi1>
    %48 = vector.broadcast %47 : vector<1x256xi1> to vector<4x256xi1>
    %49 = vector.broadcast %cst_31 : f32 to vector<4x256xf32>
    %50 = arith.select %48, %46, %49 : vector<4x256xi1>, vector<4x256xf32>
    %c0_32 = arith.constant 0 : index
    %c1 = arith.constant 1 : index
    %51 = vector.load %arg9[%c0_32, %c1] : memref<4x290xf32, #tpu.memory_space<vmem>>, vector<4x256xf32>
    %c0_33 = arith.constant 0 : index
    %c2 = arith.constant 2 : index
    %52 = vector.load %arg9[%c0_33, %c2] : memref<4x290xf32, #tpu.memory_space<vmem>>, vector<4x256xf32>
    %cst_34 = arith.constant 0.000000e+00 : f32
    %53 = vector.shape_cast %23 : vector<1x256xi1> to vector<1x256xi1>
    %54 = vector.broadcast %53 : vector<1x256xi1> to vector<4x256xi1>
    %55 = vector.broadcast %cst_34 : f32 to vector<4x256xf32>
    %56 = arith.select %54, %52, %55 : vector<4x256xi1>, vector<4x256xf32>
    %c0_35 = arith.constant 0 : index
    %c16 = arith.constant 16 : index
    %57 = vector.load %arg9[%c0_35, %c16] : memref<4x290xf32, #tpu.memory_space<vmem>>, vector<4x256xf32>
    %cst_36 = arith.constant 0.000000e+00 : f32
    %58 = vector.shape_cast %21 : vector<1x256xi1> to vector<1x256xi1>
    %59 = vector.broadcast %58 : vector<1x256xi1> to vector<4x256xi1>
    %60 = vector.broadcast %cst_36 : f32 to vector<4x256xf32>
    %61 = arith.select %59, %57, %60 : vector<4x256xi1>, vector<4x256xf32>
    %c0_37 = arith.constant 0 : index
    %c17_38 = arith.constant 17 : index
    %62 = vector.load %arg9[%c0_37, %c17_38] : memref<4x290xf32, #tpu.memory_space<vmem>>, vector<4x256xf32>
    %c0_39 = arith.constant 0 : index
    %c18 = arith.constant 18 : index
    %63 = vector.load %arg9[%c0_39, %c18] : memref<4x290xf32, #tpu.memory_space<vmem>>, vector<4x256xf32>
    %cst_40 = arith.constant 0.000000e+00 : f32
    %64 = vector.shape_cast %23 : vector<1x256xi1> to vector<1x256xi1>
    %65 = vector.broadcast %64 : vector<1x256xi1> to vector<4x256xi1>
    %66 = vector.broadcast %cst_40 : f32 to vector<4x256xf32>
    %67 = arith.select %65, %63, %66 : vector<4x256xi1>, vector<4x256xf32>
    %c0_41 = arith.constant 0 : index
    %c32 = arith.constant 32 : index
    %68 = vector.load %arg9[%c0_41, %c32] : memref<4x290xf32, #tpu.memory_space<vmem>>, vector<4x256xf32>
    %cst_42 = arith.constant 0.000000e+00 : f32
    %69 = vector.shape_cast %21 : vector<1x256xi1> to vector<1x256xi1>
    %70 = vector.broadcast %69 : vector<1x256xi1> to vector<4x256xi1>
    %71 = vector.broadcast %cst_42 : f32 to vector<4x256xf32>
    %72 = arith.select %70, %68, %71 : vector<4x256xi1>, vector<4x256xf32>
    %c0_43 = arith.constant 0 : index
    %c33 = arith.constant 33 : index
    %73 = vector.load %arg9[%c0_43, %c33] : memref<4x290xf32, #tpu.memory_space<vmem>>, vector<4x256xf32>
    %c0_44 = arith.constant 0 : index
    %c34 = arith.constant 34 : index
    %74 = vector.load %arg9[%c0_44, %c34] : memref<4x290xf32, #tpu.memory_space<vmem>>, vector<4x256xf32>
    %cst_45 = arith.constant 0.000000e+00 : f32
    %75 = vector.shape_cast %23 : vector<1x256xi1> to vector<1x256xi1>
    %76 = vector.broadcast %75 : vector<1x256xi1> to vector<4x256xi1>
    %77 = vector.broadcast %cst_45 : f32 to vector<4x256xf32>
    %78 = arith.select %76, %74, %77 : vector<4x256xi1>, vector<4x256xf32>
    %79 = tpu.concatenate %50, %51, %56, %61, %62, %67, %72, %73, %78 in 0 : vector<4x256xf32>, vector<4x256xf32>, vector<4x256xf32>, vector<4x256xf32>, vector<4x256xf32>, vector<4x256xf32>, vector<4x256xf32>, vector<4x256xf32>, vector<4x256xf32> -> vector<36x256xf32>
    %cst_46 = arith.constant dense<0.000000e+00> : vector<8x256xf32>
    %80 = tpu.matmul %28, %79, %cst_46 {dimension_numbers = #tpu.dot_dimension_numbers<[1], [0], [0], [1], [0, 0, 1, 1], [], []>} : vector<8x36xf32>, vector<36x256xf32>, vector<8x256xf32> -> vector<8x256xf32>
    %81 = vector.broadcast %29 : vector<8x1xf32> to vector<8x256xf32>
    %82 = arith.addf %80, %81 : vector<8x256xf32>
    %cst_47 = arith.constant 0.000000e+00 : f32
    %83 = vector.broadcast %cst_47 : f32 to vector<8x256xf32>
    %84 = arith.maximumf %82, %83 : vector<8x256xf32>
    %c0_48 = arith.constant 0 : index
    %c8 = arith.constant 8 : index
    %c0_49 = arith.constant 0 : index
    %85 = vector.load %arg8[%c0_48, %c8, %c0_49] : memref<2x16x256xf32, #tpu.memory_space<vmem>>, vector<1x8x256xf32>
    %86 = vector.shape_cast %85 : vector<1x8x256xf32> to vector<8x256xf32>
    %87 = vector.shape_cast %84 : vector<8x256xf32> to vector<1x8x256xf32>
    tpu.vector_store %arg8[%c0_48, %c8, %c0_49], %87 {strides = array<i32>} : memref<2x16x256xf32, #tpu.memory_space<vmem>>, vector<1x8x256xf32>,
    %c1_50 = arith.constant 1 : index
    %c0_51 = arith.constant 0 : index
    %c0_52 = arith.constant 0 : index
    %88 = vector.load %arg1[%c1_50, %c0_51, %c0_52] : memref<2x8x256xf32, #tpu.memory_space<vmem>>, vector<1x8x256xf32>
    %89 = vector.shape_cast %88 : vector<1x8x256xf32> to vector<8x256xf32>
    %cst_53 = arith.constant dense<0.000000e+00> : vector<4x256xf32>
    %90 = tpu.matmul %24, %89, %cst_53 {dimension_numbers = #tpu.dot_dimension_numbers<[1], [0], [0], [1], [0, 0, 1, 1], [], []>} : vector<4x8xf32>, vector<8x256xf32>, vector<4x256xf32> -> vector<4x256xf32>
    %91 = vector.broadcast %25 : vector<4x1xf32> to vector<4x256xf32>
    %92 = arith.addf %90, %91 : vector<4x256xf32>
    %cst_54 = arith.constant 0.000000e+00 : f32
    %93 = vector.broadcast %cst_54 : f32 to vector<4x256xf32>
    %94 = arith.maximumf %92, %93 : vector<4x256xf32>
    %cst_55 = arith.constant dense<0.000000e+00> : vector<8x256xf32>
    %95 = tpu.matmul %26, %94, %cst_55 {dimension_numbers = #tpu.dot_dimension_numbers<[1], [0], [0], [1], [0, 0, 1, 1], [], []>} : vector<8x4xf32>, vector<4x256xf32>, vector<8x256xf32> -> vector<8x256xf32>
    %96 = vector.broadcast %27 : vector<8x1xf32> to vector<8x256xf32>
    %97 = arith.addf %95, %96 : vector<8x256xf32>
    %cst_56 = arith.constant 0.000000e+00 : f32
    %98 = vector.broadcast %cst_56 : f32 to vector<8x256xf32>
    %99 = arith.maximumf %97, %98 : vector<8x256xf32>
    %c1_57 = arith.constant 1 : index
    %c0_58 = arith.constant 0 : index
    %c0_59 = arith.constant 0 : index
    %100 = vector.load %arg8[%c1_57, %c0_58, %c0_59] : memref<2x16x256xf32, #tpu.memory_space<vmem>>, vector<1x8x256xf32>
    %101 = vector.shape_cast %100 : vector<1x8x256xf32> to vector<8x256xf32>
    %102 = vector.shape_cast %99 : vector<8x256xf32> to vector<1x8x256xf32>
    tpu.vector_store %arg8[%c1_57, %c0_58, %c0_59], %102 {strides = array<i32>} : memref<2x16x256xf32, #tpu.memory_space<vmem>>, vector<1x8x256xf32>,
    %c0_60 = arith.constant 0 : index
    %c17_61 = arith.constant 17 : index
    %103 = vector.load %arg9[%c0_60, %c17_61] : memref<4x290xf32, #tpu.memory_space<vmem>>, vector<4x256xf32>
    tpu.vector_store %arg9[%c0_60, %c17_61], %94 {strides = array<i32>} : memref<4x290xf32, #tpu.memory_space<vmem>>, vector<4x256xf32>,
    %c0_62 = arith.constant 0 : index
    %c0_63 = arith.constant 0 : index
    %104 = vector.load %arg9[%c0_62, %c0_63] : memref<4x290xf32, #tpu.memory_space<vmem>>, vector<4x256xf32>
    %cst_64 = arith.constant 0.000000e+00 : f32
    %105 = vector.shape_cast %21 : vector<1x256xi1> to vector<1x256xi1>
    %106 = vector.broadcast %105 : vector<1x256xi1> to vector<4x256xi1>
    %107 = vector.broadcast %cst_64 : f32 to vector<4x256xf32>
    %108 = arith.select %106, %104, %107 : vector<4x256xi1>, vector<4x256xf32>
    %c0_65 = arith.constant 0 : index
    %c1_66 = arith.constant 1 : index
    %109 = vector.load %arg9[%c0_65, %c1_66] : memref<4x290xf32, #tpu.memory_space<vmem>>, vector<4x256xf32>
    %c0_67 = arith.constant 0 : index
    %c2_68 = arith.constant 2 : index
    %110 = vector.load %arg9[%c0_67, %c2_68] : memref<4x290xf32, #tpu.memory_space<vmem>>, vector<4x256xf32>
    %cst_69 = arith.constant 0.000000e+00 : f32
    %111 = vector.shape_cast %23 : vector<1x256xi1> to vector<1x256xi1>
    %112 = vector.broadcast %111 : vector<1x256xi1> to vector<4x256xi1>
    %113 = vector.broadcast %cst_69 : f32 to vector<4x256xf32>
    %114 = arith.select %112, %110, %113 : vector<4x256xi1>, vector<4x256xf32>
    %c0_70 = arith.constant 0 : index
    %c16_71 = arith.constant 16 : index
    %115 = vector.load %arg9[%c0_70, %c16_71] : memref<4x290xf32, #tpu.memory_space<vmem>>, vector<4x256xf32>
    %cst_72 = arith.constant 0.000000e+00 : f32
    %116 = vector.shape_cast %21 : vector<1x256xi1> to vector<1x256xi1>
    %117 = vector.broadcast %116 : vector<1x256xi1> to vector<4x256xi1>
    %118 = vector.broadcast %cst_72 : f32 to vector<4x256xf32>
    %119 = arith.select %117, %115, %118 : vector<4x256xi1>, vector<4x256xf32>
    %c0_73 = arith.constant 0 : index
    %c17_74 = arith.constant 17 : index
    %120 = vector.load %arg9[%c0_73, %c17_74] : memref<4x290xf32, #tpu.memory_space<vmem>>, vector<4x256xf32>
    %c0_75 = arith.constant 0 : index
    %c18_76 = arith.constant 18 : index
    %121 = vector.load %arg9[%c0_75, %c18_76] : memref<4x290xf32, #tpu.memory_space<vmem>>, vector<4x256xf32>
    %cst_77 = arith.constant 0.000000e+00 : f32
    %122 = vector.shape_cast %23 : vector<1x256xi1> to vector<1x256xi1>
    %123 = vector.broadcast %122 : vector<1x256xi1> to vector<4x256xi1>
    %124 = vector.broadcast %cst_77 : f32 to vector<4x256xf32>
    %125 = arith.select %123, %121, %124 : vector<4x256xi1>, vector<4x256xf32>
    %c0_78 = arith.constant 0 : index
    %c32_79 = arith.constant 32 : index
    %126 = vector.load %arg9[%c0_78, %c32_79] : memref<4x290xf32, #tpu.memory_space<vmem>>, vector<4x256xf32>
    %cst_80 = arith.constant 0.000000e+00 : f32
    %127 = vector.shape_cast %21 : vector<1x256xi1> to vector<1x256xi1>
    %128 = vector.broadcast %127 : vector<1x256xi1> to vector<4x256xi1>
    %129 = vector.broadcast %cst_80 : f32 to vector<4x256xf32>
    %130 = arith.select %128, %126, %129 : vector<4x256xi1>, vector<4x256xf32>
    %c0_81 = arith.constant 0 : index
    %c33_82 = arith.constant 33 : index
    %131 = vector.load %arg9[%c0_81, %c33_82] : memref<4x290xf32, #tpu.memory_space<vmem>>, vector<4x256xf32>
    %c0_83 = arith.constant 0 : index
    %c34_84 = arith.constant 34 : index
    %132 = vector.load %arg9[%c0_83, %c34_84] : memref<4x290xf32, #tpu.memory_space<vmem>>, vector<4x256xf32>
    %cst_85 = arith.constant 0.000000e+00 : f32
    %133 = vector.shape_cast %23 : vector<1x256xi1> to vector<1x256xi1>
    %134 = vector.broadcast %133 : vector<1x256xi1> to vector<4x256xi1>
    %135 = vector.broadcast %cst_85 : f32 to vector<4x256xf32>
    %136 = arith.select %134, %132, %135 : vector<4x256xi1>, vector<4x256xf32>
    %137 = tpu.concatenate %108, %109, %114, %119, %120, %125, %130, %131, %136 in 0 : vector<4x256xf32>, vector<4x256xf32>, vector<4x256xf32>, vector<4x256xf32>, vector<4x256xf32>, vector<4x256xf32>, vector<4x256xf32>, vector<4x256xf32>, vector<4x256xf32> -> vector<36x256xf32>
    %cst_86 = arith.constant dense<0.000000e+00> : vector<8x256xf32>
    %138 = tpu.matmul %28, %137, %cst_86 {dimension_numbers = #tpu.dot_dimension_numbers<[1], [0], [0], [1], [0, 0, 1, 1], [], []>} : vector<8x36xf32>, vector<36x256xf32>, vector<8x256xf32> -> vector<8x256xf32>
    %139 = vector.broadcast %29 : vector<8x1xf32> to vector<8x256xf32>
    %140 = arith.addf %138, %139 : vector<8x256xf32>
    %cst_87 = arith.constant 0.000000e+00 : f32
    %141 = vector.broadcast %cst_87 : f32 to vector<8x256xf32>
    %142 = arith.maximumf %140, %141 : vector<8x256xf32>
    %c1_88 = arith.constant 1 : index
    %c8_89 = arith.constant 8 : index
    %c0_90 = arith.constant 0 : index
    %143 = vector.load %arg8[%c1_88, %c8_89, %c0_90] : memref<2x16x256xf32, #tpu.memory_space<vmem>>, vector<1x8x256xf32>
    %144 = vector.shape_cast %143 : vector<1x8x256xf32> to vector<8x256xf32>
    %145 = vector.shape_cast %142 : vector<8x256xf32> to vector<1x8x256xf32>
    tpu.vector_store %arg8[%c1_88, %c8_89, %c0_90], %145 {strides = array<i32>} : memref<2x16x256xf32, #tpu.memory_space<vmem>>, vector<1x8x256xf32>,
    return
  }
  func.func @transform_0(%arg0: i32) -> (i32, i32, i32) {
    %c0_i32 = arith.constant 0 : i32
    %c0_i32_0 = arith.constant 0 : i32
    %c0_i32_1 = arith.constant 0 : i32
    return %arg0, %c0_i32, %c0_i32_0 : i32, i32, i32
  }
  func.func @transform_1(%arg0: i32) -> (i32, i32) {
    %c0_i32 = arith.constant 0 : i32
    %c0_i32_0 = arith.constant 0 : i32
    %c0_i32_1 = arith.constant 0 : i32
    return %c0_i32, %c0_i32_0 : i32, i32
  }
  func.func @transform_2(%arg0: i32) -> (i32, i32) {
    %c0_i32 = arith.constant 0 : i32
    %c0_i32_0 = arith.constant 0 : i32
    %c0_i32_1 = arith.constant 0 : i32
    return %c0_i32, %c0_i32_0 : i32, i32
  }
  func.func @transform_3(%arg0: i32) -> (i32, i32) {
    %c0_i32 = arith.constant 0 : i32
    %c0_i32_0 = arith.constant 0 : i32
    %c0_i32_1 = arith.constant 0 : i32
    return %c0_i32, %c0_i32_0 : i32, i32
  }
  func.func @transform_4(%arg0: i32) -> (i32, i32) {
    %c0_i32 = arith.constant 0 : i32
    %c0_i32_0 = arith.constant 0 : i32
    %c0_i32_1 = arith.constant 0 : i32
    return %c0_i32, %c0_i32_0 : i32, i32
  }
  func.func @transform_5(%arg0: i32) -> (i32, i32) {
    %c0_i32 = arith.constant 0 : i32
    %c0_i32_0 = arith.constant 0 : i32
    %c0_i32_1 = arith.constant 0 : i32
    return %c0_i32, %c0_i32_0 : i32, i32
  }
  func.func @transform_6(%arg0: i32) -> (i32, i32) {
    %c0_i32 = arith.constant 0 : i32
    %c0_i32_0 = arith.constant 0 : i32
    %c0_i32_1 = arith.constant 0 : i32
    return %c0_i32, %c0_i32_0 : i32, i32
  }
  func.func @transform_7(%arg0: i32) -> (i32, i32, i32) {
    %c0_i32 = arith.constant 0 : i32
    %c0_i32_0 = arith.constant 0 : i32
    %c0_i32_1 = arith.constant 0 : i32
    return %arg0, %c0_i32, %c0_i32_0 : i32, i32, i32
  }
}

</mosaic_0001>

<llo_original>
// kernel: fire_forward.1
$region0: #{fire_forward.1}
  #allocation0 [shape = 'u32[]', space=smem, size = 0x4, offset = 0x4, fixed_abs, tag = 'smem constant byte address 0x4 - core index']
  #allocation1 [shape = 'u32[72,128]{1,0:T(1,128)}', space=vmem, size = 0x9000, scoped, tag = 'internal scratch']
  #allocation2 [shape = 'f32[4,290]{1,0:T(4,128)}', space=vmem, size = 0x1800, scoped, tag = 'scratch operand']
  %s0 = inlined_call_operand.vmem [shape: f32[2,8,256], index: 0, kind: input, shape index: {}]
  %s1 = inlined_call_operand.vmem [shape: f32[4,8], index: 1, kind: input, shape index: {}]
  %s2 = inlined_call_operand.vmem [shape: f32[4,1], index: 2, kind: input, shape index: {}]
  %s3 = inlined_call_operand.vmem [shape: f32[8,4], index: 3, kind: input, shape index: {}]
  %s4 = inlined_call_operand.vmem [shape: f32[8,1], index: 4, kind: input, shape index: {}]
  %s5 = inlined_call_operand.vmem [shape: f32[8,36], index: 5, kind: input, shape index: {}]
  %s6 = inlined_call_operand.vmem [shape: f32[8,1], index: 6, kind: input, shape index: {}]
  %s7 = inlined_call_operand.vmem [shape: f32[2,16,256], index: 7, kind: output, shape index: {}]
  %s8 = sld [smem:[#allocation0]]
  $region38: #{fire_forward.1} parent=0
    _
  %s10 = ssub.s32 1, %s8
  %s11 = scalar_select 0, %s10, %s8
  // Predicated region
  $region2: #{fire_forward.1} parent=0 // pred_check
    _
  $region3: #{fire_forward.1} parent=0 // pred_check_branch
    %13 = sbr.rel (0) target = $region5
  $region4: #{fire_forward.1} parent=0 // pred_region
    _
  $region5: #{fire_forward.1} parent=0 // pred_fallthru
    _
  // Predicated region
  $region6: #{fire_forward.1} parent=0 // pred_check
    _
  $region7: #{fire_forward.1} parent=0 // pred_check_branch
    %15 = sbr.rel (0) target = $region9
  $region8: #{fire_forward.1} parent=0 // pred_region
    _
  $region9: #{fire_forward.1} parent=0 // pred_fallthru
    _
  // Predicated region
  $region10: #{fire_forward.1} parent=0 // pred_check
    _
  $region11: #{fire_forward.1} parent=0 // pred_check_branch
    %17 = sbr.rel (0) target = $region13
  $region12: #{fire_forward.1} parent=0 // pred_region
    _
  $region13: #{fire_forward.1} parent=0 // pred_fallthru
    _
  // Predicated region
  $region14: #{fire_forward.1} parent=0 // pred_check
    _
  $region15: #{fire_forward.1} parent=0 // pred_check_branch
    %19 = sbr.rel (0) target = $region17
  $region16: #{fire_forward.1} parent=0 // pred_region
    _
  $region17: #{fire_forward.1} parent=0 // pred_fallthru
    _
  // Predicated region
  $region18: #{fire_forward.1} parent=0 // pred_check
    _
  $region19: #{fire_forward.1} parent=0 // pred_check_branch
    %21 = sbr.rel (0) target = $region21
  $region20: #{fire_forward.1} parent=0 // pred_region
    _
  $region21: #{fire_forward.1} parent=0 // pred_fallthru
    _
  // Predicated region
  $region22: #{fire_forward.1} parent=0 // pred_check
    _
  $region23: #{fire_forward.1} parent=0 // pred_check_branch
    %23 = sbr.rel (0) target = $region25
  $region24: #{fire_forward.1} parent=0 // pred_region
    _
  $region25: #{fire_forward.1} parent=0 // pred_fallthru
    _
  // Predicated region
  $region26: #{fire_forward.1} parent=0 // pred_check
    _
  $region27: #{fire_forward.1} parent=0 // pred_check_branch
    %25 = sbr.rel (0) target = $region29
  $region28: #{fire_forward.1} parent=0 // pred_region
    _
  $region29: #{fire_forward.1} parent=0 // pred_fallthru
    _
  %vm26 = vcmask 134144
  %27 = vst.msk [vmem:[#allocation2] sm:$0xf] %vm26, 0.0
  %vm28 = vcmask 273544
  %29 = vst.msk [vmem:[#allocation2 + $0x8] sm:$0xf] %vm28, 0.0
  %v30 = vlaneseq
  %v31 = vand.u32 %v30, 127
  %v32 = vadd.s32 %v31, 128
  %vm33 = vcmp.lt.s32.totalorder %v31, 0
  %v34 = vsub.s32 0, %v31
  %v35 = vsel %vm33, %v34, %v31
  %v36 = vshrl.u32 %v35, 4
  %v37 = vand.u32 %v35, 15
  %v38 = vsub.s32 0, %v37
  %v39 = vsel %vm33, %v38, %v37
  %vm40 = vcmp.lt.s32.totalorder %v32, 0
  %v41 = vsub.s32 0, %v32
  %v42 = vsel %vm40, %v41, %v32
  %v43 = vshrl.u32 %v42, 4
  %v44 = vand.u32 %v42, 15
  %v45 = vsub.s32 0, %v44
  %v46 = vsel %vm40, %v45, %v44
  %vm47 = vcmp.ne.s32.totalorder %v39, 0
  %vm48 = vcmp.ne.s32.totalorder %v46, 0
  %vm49 = vcmp.lt.s32.totalorder %v39, 0
  %vm50 = vcmp.lt.s32.totalorder %v46, 0
  %vm51 = vmand %vm49, %vm47
  %vm52 = vmand %vm50, %vm48
  %v53 = vadd.s32 %v39, 16
  %v54 = vadd.s32 %v46, 16
  %v55 = vsel %vm51, %v53, %v39
  %v56 = vsel %vm52, %v54, %v46
  %vm57 = vcmp.ne.s32.totalorder %v55, 0
  %vm58 = vcmp.ne.s32.totalorder %v56, 0
  %vm59 = vcmp.ne.s32.totalorder %v55, 15
  %vm60 = vcmp.ne.s32.totalorder %v56, 15
  %v61 = vld [vmem:[%s1] sm:$0xf]
  %v62 = vld [vmem:[%s2] sm:$0xf]
  %v63 = vld [vmem:[%s3] sm:$0xff]
  %v64 = vld [vmem:[%s4] sm:$0xff]
  %v65 = vld [vmem:[%s5] sm:$0xff]
  %v66 = vld [vmem:[%s6] sm:$0xff]
  %v67 = vld [vmem:[%s0] sm:$0xff]
  %v68 = vld [vmem:[%s0 + $0x8] sm:$0xff]
  %70 = vset.pattern.permute.xlu0 0
  %71 = vperm.xlu0 %70, %v62
  %v72 = vpop.permute.xlu0 %71
  %vm74 = vcmask 64512
  %v76 = vsel %vm74, %v61, 0
  %78 = vmatpush.msra.mxu0 0.0
  %79 = vmatpush.msra.mxu0 0.0
  %80 = vmatpush.msra.mxu0 0.0
  %81 = vmatpush.msra.mxu0 0.0
  %82 = vmatpush.msra.mxu0 0.0
  %83 = vmatpush.msra.mxu0 0.0
  %84 = vmatpush.msra.mxu0 0.0
  %85 = vmatpush.msra.mxu0 0.0
  %86 = vmatpush.msra.mxu0 0.0
  %87 = vmatpush.msra.mxu0 0.0
  %88 = vmatpush.msra.mxu0 0.0
  %89 = vmatpush.msra.mxu0 0.0
  %90 = vmatpush.msra.mxu0 0.0
  %91 = vmatpush.msra.mxu0 0.0
  %92 = vmatpush.msra.mxu0 0.0
  %93 = vmatpush.msra.mxu0 %v67
  %94 = vmatmul.f32.gmra.mxu0 %v76
  %v95 = vpop.f32.mrf.mxu0
  %v96 = vadd.f32 %v72, %v95
  %97 = vdwg.mxu0
  %98 = vmatpush.msra.mxu0 0.0
  %99 = vmatpush.msra.mxu0 0.0
  %100 = vmatpush.msra.mxu0 0.0
  %101 = vmatpush.msra.mxu0 0.0
  %102 = vmatpush.msra.mxu0 0.0
  %103 = vmatpush.msra.mxu0 0.0
  %104 = vmatpush.msra.mxu0 0.0
  %105 = vmatpush.msra.mxu0 0.0
  %106 = vmatpush.msra.mxu0 0.0
  %107 = vmatpush.msra.mxu0 0.0
  %108 = vmatpush.msra.mxu0 0.0
  %109 = vmatpush.msra.mxu0 0.0
  %110 = vmatpush.msra.mxu0 0.0
  %111 = vmatpush.msra.mxu0 0.0
  %112 = vmatpush.msra.mxu0 0.0
  %113 = vmatpush.msra.mxu0 %v68
  %114 = vmatmul.f32.gmra.mxu0 %v76
  %v115 = vpop.f32.mrf.mxu0
  %v116 = vadd.f32 %v72, %v115
  %117 = vdwg.mxu0
  %v118 = vmax.f32 %v96, 0.0
  %v119 = vmax.f32 %v116, 0.0
  %121 = vset.pattern.permute.xlu0 0
  %122 = vperm.xlu0 %121, %v64
  %v123 = vpop.permute.xlu0 %122
  %vm125 = vcmask 31744
  %v127 = vsel %vm125, %v63, 0
  %vm129 = vcmask 1043456
  %v131 = vsel %vm129, %v118, 0
  %v134 = vsel %vm129, %v119, 0
  %136 = vmatpush.msra.mxu0 0.0
  %137 = vmatpush.msra.mxu0 0.0
  %138 = vmatpush.msra.mxu0 0.0
  %139 = vmatpush.msra.mxu0 0.0
  %140 = vmatpush.msra.mxu0 0.0
  %141 = vmatpush.msra.mxu0 0.0
  %142 = vmatpush.msra.mxu0 0.0
  %143 = vmatpush.msra.mxu0 0.0
  %144 = vmatpush.msra.mxu0 0.0
  %145 = vmatpush.msra.mxu0 0.0
  %146 = vmatpush.msra.mxu0 0.0
  %147 = vmatpush.msra.mxu0 0.0
  %148 = vmatpush.msra.mxu0 0.0
  %149 = vmatpush.msra.mxu0 0.0
  %150 = vmatpush.msra.mxu0 0.0
  %151 = vmatpush.msra.mxu0 %v131
  %152 = vmatmul.f32.gmra.mxu0 %v127
  %v153 = vpop.f32.mrf.mxu0
  %v154 = vadd.f32 %v123, %v153
  %155 = vdwg.mxu0
  %156 = vmatpush.msra.mxu0 0.0
  %157 = vmatpush.msra.mxu0 0.0
  %158 = vmatpush.msra.mxu0 0.0
  %159 = vmatpush.msra.mxu0 0.0
  %160 = vmatpush.msra.mxu0 0.0
  %161 = vmatpush.msra.mxu0 0.0
  %162 = vmatpush.msra.mxu0 0.0
  %163 = vmatpush.msra.mxu0 0.0
  %164 = vmatpush.msra.mxu0 0.0
  %165 = vmatpush.msra.mxu0 0.0
  %166 = vmatpush.msra.mxu0 0.0
  %167 = vmatpush.msra.mxu0 0.0
  %168 = vmatpush.msra.mxu0 0.0
  %169 = vmatpush.msra.mxu0 0.0
  %170 = vmatpush.msra.mxu0 0.0
  %171 = vmatpush.msra.mxu0 %v134
  %172 = vmatmul.f32.gmra.mxu0 %v127
  %v173 = vpop.f32.mrf.mxu0
  %v174 = vadd.f32 %v123, %v173
  %175 = vdwg.mxu0
  %v176 = vmax.f32 %v154, 0.0
  %v177 = vmax.f32 %v174, 0.0
  %178 = vst [vmem:[%s7] sm:$0xff] %v176
  %179 = vst [vmem:[%s7 + $0x8] sm:$0xff] %v177
  %v180 = vrot.slane %v119, 4
  %v181 = vsel %vm129, %v118, %v180
  %182 = vrot.lane.b32.xlu0 %v181, 17
  %v183 = vpop.permute.xlu0 %182
  %v184 = vrot.slane %v183, 4
  %vm185 = vcmask 138240
  %v186 = vsel %vm185, %v184, %v183
  %vm189 = vcmask 1043592
  %vm190 = vcmask 1047556
  %vm191 = vmor %vm190, %vm189
  %192 = vst.msk [vmem:[#allocation2] sm:$0xff] %vm191, %v186
  %193 = vst.msk [vmem:[#allocation2 + $0x8] sm:$0xf] %vm26, %v184
  %v194 = vld [vmem:[#allocation2] sm:$0xff]
  %v195 = vsel %vm57, 1, 0
  %v196 = vsel %vm58, 1, 0
  %vm197 = vcmp.eq.s32.totalorder %v195, 1
  %vm198 = vcmp.eq.s32.totalorder %v196, 1
  %200 = vst [vmem:[#allocation1] ss:$2 sm:$0xff] %v194
  %v201 = vld.sshfl [vmem:[#allocation1] sm:$0xff pattern:$0x75316420]
  %v202 = vld.sshfl [vmem:[#allocation1 + $0x8] sm:$0xff pattern:$0x75316420]
  %v205 = vsel %vm197, %v201, 0.0
  %v206 = vsel %vm198, %v202, 0.0
  %v207 = vld [vmem:[#allocation2] sm:$0xff]
  %v208 = vld [vmem:[#allocation2 + $0x8] sm:$0xf]
  %v209 = vsel %vm59, 1, 0
  %v210 = vsel %vm60, 1, 0
  %vm211 = vcmp.eq.s32.totalorder %v209, 1
  %vm212 = vcmp.eq.s32.totalorder %v210, 1
  %215 = vst [vmem:[#allocation1] ss:$2 sm:$0xff] %v207
  %s216 = scalar_lea.vmem [#allocation1], 16
  %217 = vst [vmem:[%s216] ss:$2 sm:$0xff] %v208
  %v218 = vld.sshfl [vmem:[#allocation1] sm:$0xff pattern:$0x75316420]
  %v219 = vld.sshfl [vmem:[#allocation1 + $0x8] sm:$0xff pattern:$0x75316420]
  %v220 = vld.sshfl [vmem:[#allocation1 + $0x10] sm:$0xff pattern:$0x75316420]
  %221 = vrot.lane.b32.xlu0 %v218, 126
  %v222 = vpop.permute.xlu0 %221
  %223 = vrot.lane.b32.xlu0 %v219, 126
  %v224 = vpop.permute.xlu0 %223
  %225 = vrot.lane.b32.xlu0 %v220, 126
  %v226 = vpop.permute.xlu0 %225
  %vm227 = vcmask 1031168
  %v228 = vsel %vm227, %v222, %v224
  %v229 = vsel %vm227, %v224, %v226
  %v232 = vsel %vm211, %v228, 0.0
  %v233 = vsel %vm212, %v229, 0.0
  %v234 = vld [vmem:[#allocation2] sm:$0xff]
  %v235 = vld [vmem:[#allocation2 + $0x8] sm:$0xf]
  %238 = vst [vmem:[#allocation1] ss:$2 sm:$0xff] %v234
  %s239 = scalar_lea.vmem [#allocation1], 16
  %240 = vst [vmem:[%s239] ss:$2 sm:$0xff] %v235
  %v241 = vld.sshfl [vmem:[#allocation1] sm:$0xff pattern:$0x75316420]
  %v242 = vld.sshfl [vmem:[#allocation1 + $0x8] sm:$0xff pattern:$0x75316420]
  %v243 = vld.sshfl [vmem:[#allocation1 + $0x10] sm:$0xff pattern:$0x75316420]
  %244 = vrot.lane.b32.xlu0 %v241, 112
  %v245 = vpop.permute.xlu0 %244
  %246 = vrot.lane.b32.xlu0 %v242, 112
  %v247 = vpop.permute.xlu0 %246
  %248 = vrot.lane.b32.xlu0 %v243, 112
  %v249 = vpop.permute.xlu0 %248
  %vm250 = vcmask 916480
  %v251 = vsel %vm250, %v245, %v247
  %v252 = vsel %vm250, %v247, %v249
  %v255 = vsel %vm197, %v251, 0.0
  %v256 = vsel %vm198, %v252, 0.0
  %v257 = vld [vmem:[#allocation2] sm:$0xff]
  %v258 = vld [vmem:[#allocation2 + $0x8] sm:$0xf]
  %261 = vst [vmem:[#allocation1] ss:$2 sm:$0xff] %v257
  %s262 = scalar_lea.vmem [#allocation1], 16
  %263 = vst [vmem:[%s262] ss:$2 sm:$0xff] %v258
  %v264 = vld.sshfl [vmem:[#allocation1] sm:$0xff pattern:$0x75316420]
  %v265 = vld.sshfl [vmem:[#allocation1 + $0x8] sm:$0xff pattern:$0x75316420]
  %v266 = vld.sshfl [vmem:[#allocation1 + $0x10] sm:$0xff pattern:$0x75316420]
  %267 = vrot.lane.b32.xlu0 %v264, 110
  %v268 = vpop.permute.xlu0 %267
  %269 = vrot.lane.b32.xlu0 %v265, 110
  %v270 = vpop.permute.xlu0 %269
  %271 = vrot.lane.b32.xlu0 %v266, 110
  %v272 = vpop.permute.xlu0 %271
  %vm273 = vcmask 900096
  %v274 = vsel %vm273, %v268, %v270
  %v275 = vsel %vm273, %v270, %v272
  %v278 = vsel %vm211, %v274, 0.0
  %v279 = vsel %vm212, %v275, 0.0
  %v280 = vld [vmem:[#allocation2] sm:$0xff]
  %v281 = vld [vmem:[#allocation2 + $0x8] sm:$0xf]
  %284 = vst [vmem:[#allocation1] ss:$2 sm:$0xff] %v280
  %s285 = scalar_lea.vmem [#allocation1], 16
  %286 = vst [vmem:[%s285] ss:$2 sm:$0xff] %v281
  %v287 = vld.sshfl [vmem:[#allocation1] sm:$0xff pattern:$0x75316420]
  %v288 = vld.sshfl [vmem:[#allocation1 + $0x8] sm:$0xff pattern:$0x75316420]
  %v289 = vld.sshfl [vmem:[#allocation1 + $0x10] sm:$0xff pattern:$0x75316420]
  %290 = vrot.lane.b32.xlu0 %v287, 96
  %v291 = vpop.permute.xlu0 %290
  %292 = vrot.lane.b32.xlu0 %v288, 96
  %v293 = vpop.permute.xlu0 %292
  %294 = vrot.lane.b32.xlu0 %v289, 96
  %v295 = vpop.permute.xlu0 %294
  %vm296 = vcmask 785408
  %v297 = vsel %vm296, %v291, %v293
  %v298 = vsel %vm296, %v293, %v295
  %v301 = vsel %vm197, %v297, 0.0
  %v302 = vsel %vm198, %v298, 0.0
  %v303 = vld [vmem:[#allocation2] sm:$0xff]
  %v304 = vld [vmem:[#allocation2 + $0x8] sm:$0xf]
  %307 = vst [vmem:[#allocation1] ss:$2 sm:$0xff] %v303
  %s308 = scalar_lea.vmem [#allocation1], 16
  %309 = vst [vmem:[%s308] ss:$2 sm:$0xff] %v304
  %v310 = vld.sshfl [vmem:[#allocation1] sm:$0xff pattern:$0x75316420]
  %v311 = vld.sshfl [vmem:[#allocation1 + $0x8] sm:$0xff pattern:$0x75316420]
  %v312 = vld.sshfl [vmem:[#allocation1 + $0x10] sm:$0xff pattern:$0x75316420]
  %313 = vrot.lane.b32.xlu0 %v310, 94
  %v314 = vpop.permute.xlu0 %313
  %315 = vrot.lane.b32.xlu0 %v311, 94
  %v316 = vpop.permute.xlu0 %315
  %317 = vrot.lane.b32.xlu0 %v312, 94
  %v318 = vpop.permute.xlu0 %317
  %vm319 = vcmask 769024
  %v320 = vsel %vm319, %v314, %v316
  %v321 = vsel %vm319, %v316, %v318
  %v324 = vsel %vm211, %v320, 0.0
  %v325 = vsel %vm212, %v321, 0.0
  %s326 = scalar_lea.vmem [#allocation1], 1
  %327 = vst [vmem:[%s326] ss:$2 sm:$0xff] %v207
  %s328 = scalar_lea.vmem [#allocation1], 17
  %329 = vst [vmem:[%s328] ss:$2 sm:$0xff] %v208
  %v330 = vld.sshfl [vmem:[#allocation1] sm:$0xff pattern:$0x75316420]
  %v331 = vld.sshfl [vmem:[#allocation1 + $0x8] sm:$0xff pattern:$0x75316420]
  %v332 = vld.sshfl [vmem:[#allocation1 + $0x10] sm:$0xff pattern:$0x75316420]
  %333 = vrot.lane.b32.xlu0 %v330, 127
  %v334 = vpop.permute.xlu0 %333
  %335 = vrot.lane.b32.xlu0 %v331, 127
  %v336 = vpop.permute.xlu0 %335
  %337 = vrot.lane.b32.xlu0 %v332, 127
  %v338 = vpop.permute.xlu0 %337
  %vm339 = vcmask 1039360
  %v340 = vsel %vm339, %v334, %v336
  %v341 = vsel %vm339, %v336, %v338
  %v346 = vrot.slane %v255, 4
  %v347 = vrot.slane %v256, 4
  %350 = vst [vmem:[#allocation1] ss:$2 sm:$0xff] %v257
  %s351 = scalar_lea.vmem [#allocation1], 16
  %352 = vst [vmem:[%s351] ss:$2 sm:$0xff] %v258
  %v353 = vld.sshfl [vmem:[#allocation1] sm:$0xff pattern:$0x75316420]
  %v354 = vld.sshfl [vmem:[#allocation1 + $0x8] sm:$0xff pattern:$0x75316420]
  %v355 = vld.sshfl [vmem:[#allocation1 + $0x10] sm:$0xff pattern:$0x75316420]
  %356 = vrot.lane.b32.xlu0 %v353, 111
  %v357 = vpop.permute.xlu0 %356
  %358 = vrot.lane.b32.xlu0 %v354, 111
  %v359 = vpop.permute.xlu0 %358
  %360 = vrot.lane.b32.xlu0 %v355, 111
  %v361 = vpop.permute.xlu0 %360
  %vm362 = vcmask 908288
  %v363 = vsel %vm362, %v357, %v359
  %v364 = vsel %vm362, %v359, %v361
  %v369 = vrot.slane %v278, 4
  %v370 = vrot.slane %v279, 4
  %s373 = scalar_lea.vmem [#allocation1], 1
  %374 = vst [vmem:[%s373] ss:$2 sm:$0xff] %v303
  %s375 = scalar_lea.vmem [#allocation1], 17
  %376 = vst [vmem:[%s375] ss:$2 sm:$0xff] %v304
  %v377 = vld.sshfl [vmem:[#allocation1] sm:$0xff pattern:$0x75316420]
  %v378 = vld.sshfl [vmem:[#allocation1 + $0x8] sm:$0xff pattern:$0x75316420]
  %v379 = vld.sshfl [vmem:[#allocation1 + $0x10] sm:$0xff pattern:$0x75316420]
  %380 = vrot.lane.b32.xlu0 %v377, 95
  %v381 = vpop.permute.xlu0 %380
  %382 = vrot.lane.b32.xlu0 %v378, 95
  %v383 = vpop.permute.xlu0 %382
  %384 = vrot.lane.b32.xlu0 %v379, 95
  %v385 = vpop.permute.xlu0 %384
  %vm386 = vcmask 777216
  %v387 = vsel %vm386, %v381, %v383
  %v388 = vsel %vm386, %v383, %v385
  %v391 = vsel %vm129, %v205, %v340
  %v392 = vsel %vm129, %v206, %v341
  %v393 = vsel %vm129, %v232, %v346
  %v394 = vsel %vm129, %v233, %v347
  %v395 = vsel %vm129, %v363, %v369
  %v396 = vsel %vm129, %v364, %v370
  %v397 = vsel %vm129, %v301, %v387
  %v398 = vsel %vm129, %v302, %v388
  %400 = vset.pattern.permute.xlu0 0
  %401 = vperm.xlu0 %400, %v66
  %v402 = vpop.permute.xlu0 %401
  %vm404 = vcmask 293888
  %v406 = vsel %vm404, %v65, 0
  %v409 = vsel %vm129, %v324, 0
  %v412 = vsel %vm129, %v325, 0
  %414 = vmatpush.msra.mxu0 0.0
  %415 = vmatpush.msra.mxu0 0.0
  %416 = vmatpush.msra.mxu0 0.0
  %417 = vmatpush.msra.mxu0 0.0
  %418 = vmatpush.msra.mxu0 0.0
  %419 = vmatpush.msra.mxu0 0.0
  %420 = vmatpush.msra.mxu0 0.0
  %421 = vmatpush.msra.mxu0 0.0
  %422 = vmatpush.msra.mxu0 0.0
  %423 = vmatpush.msra.mxu0 0.0
  %424 = vmatpush.msra.mxu0 0.0
  %425 = vmatpush.msra.mxu0 %v409
  %426 = vmatpush.msra.mxu0 %v397
  %427 = vmatpush.msra.mxu0 %v395
  %428 = vmatpush.msra.mxu0 %v393
  %429 = vmatpush.msra.mxu0 %v391
  %430 = vmatmul.f32.gmra.mxu0 %v406
  %v431 = vpop.f32.mrf.mxu0
  %v432 = vadd.f32 %v402, %v431
  %433 = vdwg.mxu0
  %434 = vmatpush.msra.mxu0 0.0
  %435 = vmatpush.msra.mxu0 0.0
  %436 = vmatpush.msra.mxu0 0.0
  %437 = vmatpush.msra.mxu0 0.0
  %438 = vmatpush.msra.mxu0 0.0
  %439 = vmatpush.msra.mxu0 0.0
  %440 = vmatpush.msra.mxu0 0.0
  %441 = vmatpush.msra.mxu0 0.0
  %442 = vmatpush.msra.mxu0 0.0
  %443 = vmatpush.msra.mxu0 0.0
  %444 = vmatpush.msra.mxu0 0.0
  %445 = vmatpush.msra.mxu0 %v412
  %446 = vmatpush.msra.mxu0 %v398
  %447 = vmatpush.msra.mxu0 %v396
  %448 = vmatpush.msra.mxu0 %v394
  %449 = vmatpush.msra.mxu0 %v392
  %450 = vmatmul.f32.gmra.mxu0 %v406
  %v451 = vpop.f32.mrf.mxu0
  %v452 = vadd.f32 %v402, %v451
  %453 = vdwg.mxu0
  %v454 = vmax.f32 %v432, 0.0
  %v455 = vmax.f32 %v452, 0.0
  %456 = vst [vmem:[%s7 + $0x10] sm:$0xff] %v454
  %457 = vst [vmem:[%s7 + $0x18] sm:$0xff] %v455
  %s458 = scalar_lea.vmem %s0, 16
  %v459 = vld [vmem:[%s458] sm:$0xff]
  %v460 = vld [vmem:[%s458 + $0x8] sm:$0xff]
  %461 = vmatpush.msra.mxu0 0.0
  %462 = vmatpush.msra.mxu0 0.0
  %463 = vmatpush.msra.mxu0 0.0
  %464 = vmatpush.msra.mxu0 0.0
  %465 = vmatpush.msra.mxu0 0.0
  %466 = vmatpush.msra.mxu0 0.0
  %467 = vmatpush.msra.mxu0 0.0
  %468 = vmatpush.msra.mxu0 0.0
  %469 = vmatpush.msra.mxu0 0.0
  %470 = vmatpush.msra.mxu0 0.0
  %471 = vmatpush.msra.mxu0 0.0
  %472 = vmatpush.msra.mxu0 0.0
  %473 = vmatpush.msra.mxu0 0.0
  %474 = vmatpush.msra.mxu0 0.0
  %475 = vmatpush.msra.mxu0 0.0
  %476 = vmatpush.msra.mxu0 %v459
  %477 = vmatmul.f32.gmra.mxu0 %v76
  %v478 = vpop.f32.mrf.mxu0
  %v479 = vadd.f32 %v72, %v478
  %480 = vdwg.mxu0
  %481 = vmatpush.msra.mxu0 0.0
  %482 = vmatpush.msra.mxu0 0.0
  %483 = vmatpush.msra.mxu0 0.0
  %484 = vmatpush.msra.mxu0 0.0
  %485 = vmatpush.msra.mxu0 0.0
  %486 = vmatpush.msra.mxu0 0.0
  %487 = vmatpush.msra.mxu0 0.0
  %488 = vmatpush.msra.mxu0 0.0
  %489 = vmatpush.msra.mxu0 0.0
  %490 = vmatpush.msra.mxu0 0.0
  %491 = vmatpush.msra.mxu0 0.0
  %492 = vmatpush.msra.mxu0 0.0
  %493 = vmatpush.msra.mxu0 0.0
  %494 = vmatpush.msra.mxu0 0.0
  %495 = vmatpush.msra.mxu0 0.0
  %496 = vmatpush.msra.mxu0 %v460
  %497 = vmatmul.f32.gmra.mxu0 %v76
  %v498 = vpop.f32.mrf.mxu0
  %v499 = vadd.f32 %v72, %v498
  %500 = vdwg.mxu0
  %v501 = vmax.f32 %v479, 0.0
  %v502 = vmax.f32 %v499, 0.0
  %v504 = vsel %vm129, %v501, 0
  %v507 = vsel %vm129, %v502, 0
  %509 = vmatpush.msra.mxu0 0.0
  %510 = vmatpush.msra.mxu0 0.0
  %511 = vmatpush.msra.mxu0 0.0
  %512 = vmatpush.msra.mxu0 0.0
  %513 = vmatpush.msra.mxu0 0.0
  %514 = vmatpush.msra.mxu0 0.0
  %515 = vmatpush.msra.mxu0 0.0
  %516 = vmatpush.msra.mxu0 0.0
  %517 = vmatpush.msra.mxu0 0.0
  %518 = vmatpush.msra.mxu0 0.0
  %519 = vmatpush.msra.mxu0 0.0
  %520 = vmatpush.msra.mxu0 0.0
  %521 = vmatpush.msra.mxu0 0.0
  %522 = vmatpush.msra.mxu0 0.0
  %523 = vmatpush.msra.mxu0 0.0
  %524 = vmatpush.msra.mxu0 %v504
  %525 = vmatmul.f32.gmra.mxu0 %v127
  %v526 = vpop.f32.mrf.mxu0
  %v527 = vadd.f32 %v123, %v526
  %528 = vdwg.mxu0
  %529 = vmatpush.msra.mxu0 0.0
  %530 = vmatpush.msra.mxu0 0.0
  %531 = vmatpush.msra.mxu0 0.0
  %532 = vmatpush.msra.mxu0 0.0
  %533 = vmatpush.msra.mxu0 0.0
  %534 = vmatpush.msra.mxu0 0.0
  %535 = vmatpush.msra.mxu0 0.0
  %536 = vmatpush.msra.mxu0 0.0
  %537 = vmatpush.msra.mxu0 0.0
  %538 = vmatpush.msra.mxu0 0.0
  %539 = vmatpush.msra.mxu0 0.0
  %540 = vmatpush.msra.mxu0 0.0
  %541 = vmatpush.msra.mxu0 0.0
  %542 = vmatpush.msra.mxu0 0.0
  %543 = vmatpush.msra.mxu0 0.0
  %544 = vmatpush.msra.mxu0 %v507
  %545 = vmatmul.f32.gmra.mxu0 %v127
  %v546 = vpop.f32.mrf.mxu0
  %v547 = vadd.f32 %v123, %v546
  %548 = vdwg.mxu0
  %v549 = vmax.f32 %v527, 0.0
  %v550 = vmax.f32 %v547, 0.0
  %s551 = scalar_lea.vmem %s7, 32
  %552 = vst [vmem:[%s551] sm:$0xff] %v549
  %553 = vst [vmem:[%s551 + $0x8] sm:$0xff] %v550
  %v554 = vrot.slane %v502, 4
  %v555 = vsel %vm129, %v501, %v554
  %556 = vrot.lane.b32.xlu0 %v555, 17
  %v557 = vpop.permute.xlu0 %556
  %v558 = vrot.slane %v557, 4
  %v559 = vsel %vm185, %v558, %v557
  %562 = vst.msk [vmem:[#allocation2] sm:$0xff] %vm191, %v559
  %563 = vst.msk [vmem:[#allocation2 + $0x8] sm:$0xf] %vm26, %v558
  %v564 = vld [vmem:[#allocation2] sm:$0xff]
  %566 = vst [vmem:[#allocation1] ss:$2 sm:$0xff] %v564
  %v567 = vld.sshfl [vmem:[#allocation1] sm:$0xff pattern:$0x75316420]
  %v568 = vld.sshfl [vmem:[#allocation1 + $0x8] sm:$0xff pattern:$0x75316420]
  %v571 = vsel %vm197, %v567, 0.0
  %v572 = vsel %vm198, %v568, 0.0
  %v573 = vld [vmem:[#allocation2] sm:$0xff]
  %v574 = vld [vmem:[#allocation2 + $0x8] sm:$0xf]
  %577 = vst [vmem:[#allocation1] ss:$2 sm:$0xff] %v573
  %s578 = scalar_lea.vmem [#allocation1], 16
  %579 = vst [vmem:[%s578] ss:$2 sm:$0xff] %v574
  %v580 = vld.sshfl [vmem:[#allocation1] sm:$0xff pattern:$0x75316420]
  %v581 = vld.sshfl [vmem:[#allocation1 + $0x8] sm:$0xff pattern:$0x75316420]
  %v582 = vld.sshfl [vmem:[#allocation1 + $0x10] sm:$0xff pattern:$0x75316420]
  %583 = vrot.lane.b32.xlu0 %v580, 126
  %v584 = vpop.permute.xlu0 %583
  %585 = vrot.lane.b32.xlu0 %v581, 126
  %v586 = vpop.permute.xlu0 %585
  %587 = vrot.lane.b32.xlu0 %v582, 126
  %v588 = vpop.permute.xlu0 %587
  %v589 = vsel %vm227, %v584, %v586
  %v590 = vsel %vm227, %v586, %v588
  %v593 = vsel %vm211, %v589, 0.0
  %v594 = vsel %vm212, %v590, 0.0
  %v595 = vld [vmem:[#allocation2] sm:$0xff]
  %v596 = vld [vmem:[#allocation2 + $0x8] sm:$0xf]
  %599 = vst [vmem:[#allocation1] ss:$2 sm:$0xff] %v595
  %s600 = scalar_lea.vmem [#allocation1], 16
  %601 = vst [vmem:[%s600] ss:$2 sm:$0xff] %v596
  %v602 = vld.sshfl [vmem:[#allocation1] sm:$0xff pattern:$0x75316420]
  %v603 = vld.sshfl [vmem:[#allocation1 + $0x8] sm:$0xff pattern:$0x75316420]
  %v604 = vld.sshfl [vmem:[#allocation1 + $0x10] sm:$0xff pattern:$0x75316420]
  %605 = vrot.lane.b32.xlu0 %v602, 112
  %v606 = vpop.permute.xlu0 %605
  %607 = vrot.lane.b32.xlu0 %v603, 112
  %v608 = vpop.permute.xlu0 %607
  %609 = vrot.lane.b32.xlu0 %v604, 112
  %v610 = vpop.permute.xlu0 %609
  %v611 = vsel %vm250, %v606, %v608
  %v612 = vsel %vm250, %v608, %v610
  %v615 = vsel %vm197, %v611, 0.0
  %v616 = vsel %vm198, %v612, 0.0
  %v617 = vld [vmem:[#allocation2] sm:$0xff]
  %v618 = vld [vmem:[#allocation2 + $0x8] sm:$0xf]
  %621 = vst [vmem:[#allocation1] ss:$2 sm:$0xff] %v617
  %s622 = scalar_lea.vmem [#allocation1], 16
  %623 = vst [vmem:[%s622] ss:$2 sm:$0xff] %v618
  %v624 = vld.sshfl [vmem:[#allocation1] sm:$0xff pattern:$0x75316420]
  %v625 = vld.sshfl [vmem:[#allocation1 + $0x8] sm:$0xff pattern:$0x75316420]
  %v626 = vld.sshfl [vmem:[#allocation1 + $0x10] sm:$0xff pattern:$0x75316420]
  %627 = vrot.lane.b32.xlu0 %v624, 110
  %v628 = vpop.permute.xlu0 %627
  %629 = vrot.lane.b32.xlu0 %v625, 110
  %v630 = vpop.permute.xlu0 %629
  %631 = vrot.lane.b32.xlu0 %v626, 110
  %v632 = vpop.permute.xlu0 %631
  %v633 = vsel %vm273, %v628, %v630
  %v634 = vsel %vm273, %v630, %v632
  %v637 = vsel %vm211, %v633, 0.0
  %v638 = vsel %vm212, %v634, 0.0
  %v639 = vld [vmem:[#allocation2] sm:$0xff]
  %v640 = vld [vmem:[#allocation2 + $0x8] sm:$0xf]
  %643 = vst [vmem:[#allocation1] ss:$2 sm:$0xff] %v639
  %s644 = scalar_lea.vmem [#allocation1], 16
  %645 = vst [vmem:[%s644] ss:$2 sm:$0xff] %v640
  %v646 = vld.sshfl [vmem:[#allocation1] sm:$0xff pattern:$0x75316420]
  %v647 = vld.sshfl [vmem:[#allocation1 + $0x8] sm:$0xff pattern:$0x75316420]
  %v648 = vld.sshfl [vmem:[#allocation1 + $0x10] sm:$0xff pattern:$0x75316420]
  %649 = vrot.lane.b32.xlu0 %v646, 96
  %v650 = vpop.permute.xlu0 %649
  %651 = vrot.lane.b32.xlu0 %v647, 96
  %v652 = vpop.permute.xlu0 %651
  %653 = vrot.lane.b32.xlu0 %v648, 96
  %v654 = vpop.permute.xlu0 %653
  %v655 = vsel %vm296, %v650, %v652
  %v656 = vsel %vm296, %v652, %v654
  %v659 = vsel %vm197, %v655, 0.0
  %v660 = vsel %vm198, %v656, 0.0
  %v661 = vld [vmem:[#allocation2] sm:$0xff]
  %v662 = vld [vmem:[#allocation2 + $0x8] sm:$0xf]
  %665 = vst [vmem:[#allocation1] ss:$2 sm:$0xff] %v661
  %s666 = scalar_lea.vmem [#allocation1], 16
  %667 = vst [vmem:[%s666] ss:$2 sm:$0xff] %v662
  %v668 = vld.sshfl [vmem:[#allocation1] sm:$0xff pattern:$0x75316420]
  %v669 = vld.sshfl [vmem:[#allocation1 + $0x8] sm:$0xff pattern:$0x75316420]
  %v670 = vld.sshfl [vmem:[#allocation1 + $0x10] sm:$0xff pattern:$0x75316420]
  %671 = vrot.lane.b32.xlu0 %v668, 94
  %v672 = vpop.permute.xlu0 %671
  %673 = vrot.lane.b32.xlu0 %v669, 94
  %v674 = vpop.permute.xlu0 %673
  %675 = vrot.lane.b32.xlu0 %v670, 94
  %v676 = vpop.permute.xlu0 %675
  %v677 = vsel %vm319, %v672, %v674
  %v678 = vsel %vm319, %v674, %v676
  %v681 = vsel %vm211, %v677, 0.0
  %v682 = vsel %vm212, %v678, 0.0
  %s683 = scalar_lea.vmem [#allocation1], 1
  %684 = vst [vmem:[%s683] ss:$2 sm:$0xff] %v573
  %s685 = scalar_lea.vmem [#allocation1], 17
  %686 = vst [vmem:[%s685] ss:$2 sm:$0xff] %v574
  %v687 = vld.sshfl [vmem:[#allocation1] sm:$0xff pattern:$0x75316420]
  %v688 = vld.sshfl [vmem:[#allocation1 + $0x8] sm:$0xff pattern:$0x75316420]
  %v689 = vld.sshfl [vmem:[#allocation1 + $0x10] sm:$0xff pattern:$0x75316420]
  %690 = vrot.lane.b32.xlu0 %v687, 127
  %v691 = vpop.permute.xlu0 %690
  %692 = vrot.lane.b32.xlu0 %v688, 127
  %v693 = vpop.permute.xlu0 %692
  %694 = vrot.lane.b32.xlu0 %v689, 127
  %v695 = vpop.permute.xlu0 %694
  %v696 = vsel %vm339, %v691, %v693
  %v697 = vsel %vm339, %v693, %v695
  %v702 = vrot.slane %v615, 4
  %v703 = vrot.slane %v616, 4
  %706 = vst [vmem:[#allocation1] ss:$2 sm:$0xff] %v617
  %s707 = scalar_lea.vmem [#allocation1], 16
  %708 = vst [vmem:[%s707] ss:$2 sm:$0xff] %v618
  %v709 = vld.sshfl [vmem:[#allocation1] sm:$0xff pattern:$0x75316420]
  %v710 = vld.sshfl [vmem:[#allocation1 + $0x8] sm:$0xff pattern:$0x75316420]
  %v711 = vld.sshfl [vmem:[#allocation1 + $0x10] sm:$0xff pattern:$0x75316420]
  %712 = vrot.lane.b32.xlu0 %v709, 111
  %v713 = vpop.permute.xlu0 %712
  %714 = vrot.lane.b32.xlu0 %v710, 111
  %v715 = vpop.permute.xlu0 %714
  %716 = vrot.lane.b32.xlu0 %v711, 111
  %v717 = vpop.permute.xlu0 %716
  %v718 = vsel %vm362, %v713, %v715
  %v719 = vsel %vm362, %v715, %v717
  %v724 = vrot.slane %v637, 4
  %v725 = vrot.slane %v638, 4
  %s728 = scalar_lea.vmem [#allocation1], 1
  %729 = vst [vmem:[%s728] ss:$2 sm:$0xff] %v661
  %s730 = scalar_lea.vmem [#allocation1], 17
  %731 = vst [vmem:[%s730] ss:$2 sm:$0xff] %v662
  %v732 = vld.sshfl [vmem:[#allocation1] sm:$0xff pattern:$0x75316420]
  %v733 = vld.sshfl [vmem:[#allocation1 + $0x8] sm:$0xff pattern:$0x75316420]
  %v734 = vld.sshfl [vmem:[#allocation1 + $0x10] sm:$0xff pattern:$0x75316420]
  %735 = vrot.lane.b32.xlu0 %v732, 95
  %v736 = vpop.permute.xlu0 %735
  %737 = vrot.lane.b32.xlu0 %v733, 95
  %v738 = vpop.permute.xlu0 %737
  %739 = vrot.lane.b32.xlu0 %v734, 95
  %v740 = vpop.permute.xlu0 %739
  %v741 = vsel %vm386, %v736, %v738
  %v742 = vsel %vm386, %v738, %v740
  %v745 = vsel %vm129, %v571, %v696
  %v746 = vsel %vm129, %v572, %v697
  %v747 = vsel %vm129, %v593, %v702
  %v748 = vsel %vm129, %v594, %v703
  %v749 = vsel %vm129, %v718, %v724
  %v750 = vsel %vm129, %v719, %v725
  %v751 = vsel %vm129, %v659, %v741
  %v752 = vsel %vm129, %v660, %v742
  %v754 = vsel %vm129, %v681, 0
  %v757 = vsel %vm129, %v682, 0
  %759 = vmatpush.msra.mxu0 0.0
  %760 = vmatpush.msra.mxu0 0.0
  %761 = vmatpush.msra.mxu0 0.0
  %762 = vmatpush.msra.mxu0 0.0
  %763 = vmatpush.msra.mxu0 0.0
  %764 = vmatpush.msra.mxu0 0.0
  %765 = vmatpush.msra.mxu0 0.0
  %766 = vmatpush.msra.mxu0 0.0
  %767 = vmatpush.msra.mxu0 0.0
  %768 = vmatpush.msra.mxu0 0.0
  %769 = vmatpush.msra.mxu0 0.0
  %770 = vmatpush.msra.mxu0 %v754
  %771 = vmatpush.msra.mxu0 %v751
  %772 = vmatpush.msra.mxu0 %v749
  %773 = vmatpush.msra.mxu0 %v747
  %774 = vmatpush.msra.mxu0 %v745
  %775 = vmatmul.f32.gmra.mxu0 %v406
  %v776 = vpop.f32.mrf.mxu0
  %v777 = vadd.f32 %v402, %v776
  %778 = vdwg.mxu0
  %779 = vmatpush.msra.mxu0 0.0
  %780 = vmatpush.msra.mxu0 0.0
  %781 = vmatpush.msra.mxu0 0.0
  %782 = vmatpush.msra.mxu0 0.0
  %783 = vmatpush.msra.mxu0 0.0
  %784 = vmatpush.msra.mxu0 0.0
  %785 = vmatpush.msra.mxu0 0.0
  %786 = vmatpush.msra.mxu0 0.0
  %787 = vmatpush.msra.mxu0 0.0
  %788 = vmatpush.msra.mxu0 0.0
  %789 = vmatpush.msra.mxu0 0.0
  %790 = vmatpush.msra.mxu0 %v757
  %791 = vmatpush.msra.mxu0 %v752
  %792 = vmatpush.msra.mxu0 %v750
  %793 = vmatpush.msra.mxu0 %v748
  %794 = vmatpush.msra.mxu0 %v746
  %795 = vmatmul.f32.gmra.mxu0 %v406
  %v796 = vpop.f32.mrf.mxu0
  %v797 = vadd.f32 %v402, %v796
  %798 = vdwg.mxu0
  %v799 = vmax.f32 %v777, 0.0
  %v800 = vmax.f32 %v797, 0.0
  %801 = vst [vmem:[%s551 + $0x10] sm:$0xff] %v799
  %802 = vst [vmem:[%s551 + $0x18] sm:$0xff] %v800
  // Predicated region
  $region30: #{fire_forward.1} parent=0 // pred_check
    _
  $region31: #{fire_forward.1} parent=0 // pred_check_branch
    %804 = sbr.rel (0) target = $region33
  $region32: #{fire_forward.1} parent=0 // pred_region
    _
  $region33: #{fire_forward.1} parent=0 // pred_fallthru
    _
  // Predicated region
  $region34: #{fire_forward.1} parent=0 // pred_check
    _
  $region35: #{fire_forward.1} parent=0 // pred_check_branch
    %806 = sbr.rel (0) target = $region37
  $region36: #{fire_forward.1} parent=0 // pred_region
    _
  $region37: #{fire_forward.1} parent=0 // pred_fallthru
    _

</llo_original>
